<compile_context>
chip_gen: v5e
topology: v5e:2x2
jax: 0.10.0
libtpu: 0.0.40
codegen_flags: <defaults>
</compile_context>

<pallas_src>
import functools

import jax
import jax.numpy as jnp
import numpy as np
from jax.experimental import pallas as pl
from jax.experimental.pallas import tpu as pltpu


def make_divisible(v, divisor=8, min_value=None):
    min_value = min_value or divisor
    new_v = max(min_value, int(v + divisor / 2) // divisor * divisor)
    if new_v < 0.9 * v:
        new_v += divisor
    return new_v


# ---------------------------------------------------------------------------
# Fused SqueezeExcite kernel:
#   pool -> conv_reduce(+bias) -> ReLU -> conv_expand(+bias) -> sigmoid -> x*gate
# ---------------------------------------------------------------------------
def _se_kernel(x_ref, wr_ref, br_ref, wet_ref, be_ref, o_ref, *, inv_hw):
    # x_ref  : (Nb, C, HWp)  channel-major activations, lane axis = padded H*W
    # wr_ref : (C, Cred)     conv_reduce weight, transposed  (= w_reduce.T)
    # br_ref : (1, Cred)     conv_reduce bias
    # wet_ref: (Cred, C)     conv_expand weight, transposed  (= w_expand.T)
    # be_ref : (1, C)        conv_expand bias
    # o_ref  : (Nb, C, HWp)

    # Global average pool over spatial dims. Accumulate in f32 (bf16-safe);
    # padded spatial columns are zero, so dividing by the true HW is exact.
    pooled = jnp.sum(x_ref[...].astype(jnp.float32), axis=2) * inv_hw      # (Nb, C)

    # conv_reduce + ReLU and conv_expand as (Nb, C) x (C, Cred) MXU dots.
    r = jnp.dot(pooled, wr_ref[...], preferred_element_type=jnp.float32)
    r = jnp.maximum(r + br_ref[...], 0.0)                                  # (Nb, Cred)
    g = jnp.dot(r, wet_ref[...], preferred_element_type=jnp.float32)
    g = g + be_ref[...]                                                    # (Nb, C)

    # Exact sigmoid gate (tiny tensor; exp goes to the EUP slot).
    gate = 1.0 / (1.0 + jnp.exp(-g))                                       # (Nb, C)

    # Re-read x from VMEM for the gating multiply (don't keep the whole tile
    # live in vregs across the pool -> dot -> gate chain).
    o_ref[...] = (x_ref[...].astype(jnp.float32) * gate[:, :, None]).astype(o_ref.dtype)


# ---------------------------------------------------------------------------
# Wrapper (accepts PyTorch-style NCHW)
# ---------------------------------------------------------------------------
def squeeze_excite_forward(x_nchw, w_reduce, b_reduce, w_expand, b_expand,
                           target_block_bytes=2 * 1024 * 1024):
    """x_nchw: (N, C, H, W).  w_reduce: (Cred, C), b_reduce: (Cred,),
    w_expand: (C, Cred), b_expand: (C,)  (1x1 conv weights, squeezed)."""
    N, C, H, W = x_nchw.shape
    HW = H * W
    Cred = w_reduce.shape[0]
    itemsize = jnp.dtype(x_nchw.dtype).itemsize

    # Channel-major (N, C, HW); pad the lane axis to a multiple of 128 so the
    # output stores are unmasked, lane-dense vst (no vst.msk partial stores).
    x = x_nchw.reshape(N, C, HW)
    HWp = ((HW + 127) // 128) * 128
    if HWp != HW:
        x = jnp.pad(x, ((0, 0), (0, 0), (0, HWp - HW)))

    # Fold the batch into the block: largest Nb with block ~target_block_bytes.
    per_image = C * HWp * itemsize
    Nb = int(max(1, min(N, target_block_bytes // max(per_image, 1))))
    num_blocks = pl.cdiv(N, Nb)
    # If everything collapsed into one *large* block, split into two so both
    # v7x TensorCores get work. Keep a single block at toy sizes (single-TC
    # parts prefer the largest block; splitting 16 KiB blocks is pure overhead).
    if N >= 2 and num_blocks == 1 and per_image * pl.cdiv(N, 2) >= 512 * 1024:
        Nb = pl.cdiv(N, 2)
        num_blocks = pl.cdiv(N, Nb)

    # Pad batch so the grid tiles it exactly; padded rows are zero and their
    # outputs are sliced away below.
    Np = num_blocks * Nb
    if Np != N:
        x = jnp.pad(x, ((0, Np - N), (0, 0), (0, 0)))

    wr = jnp.transpose(w_reduce).astype(jnp.float32)       # (C, Cred)
    br = b_reduce.reshape(1, Cred).astype(jnp.float32)     # (1, Cred)
    wet = jnp.transpose(w_expand).astype(jnp.float32)      # (Cred, C)
    be = b_expand.reshape(1, C).astype(jnp.float32)        # (1, C)

    kernel = functools.partial(_se_kernel, inv_hw=1.0 / float(HW))

    cost = pl.CostEstimate(
        flops=4 * Np * C * Cred + 2 * Np * C * HWp,          # SE dots + pool/gate
        transcendentals=Np * C,                              # exp in the sigmoid
        bytes_accessed=2 * Np * C * HWp * itemsize,          # read x + write y
    )

    y = pl.pallas_call(
        kernel,
        out_shape=jax.ShapeDtypeStruct((Np, C, HWp), x.dtype),
        grid=(num_blocks,),
        in_specs=[
            pl.BlockSpec((Nb, C, HWp), lambda n: (n, 0, 0)),
            pl.BlockSpec((C, Cred), lambda n: (0, 0)),
            pl.BlockSpec((1, Cred), lambda n: (0, 0)),
            pl.BlockSpec((Cred, C), lambda n: (0, 0)),
            pl.BlockSpec((1, C), lambda n: (0, 0)),
        ],
        out_specs=pl.BlockSpec((Nb, C, HWp), lambda n: (n, 0, 0)),
        compiler_params=pltpu.CompilerParams(dimension_semantics=("parallel",)),
        cost_estimate=cost,
    )(x, wr, br, wet, be)

    y = y[:N, :, :HW].reshape(N, C, H, W)
    return y


# ---------------------------------------------------------------------------
# Pure-JAX reference (correctness check)
# ---------------------------------------------------------------------------
def reference_forward(x, w_reduce, b_reduce, w_expand, b_expand):
    pooled = jnp.mean(x, axis=(2, 3))                            # (N, C)
    r = jnp.maximum(pooled @ w_reduce.T + b_reduce, 0.0)         # (N, Cred)
    g = jax.nn.sigmoid(r @ w_expand.T + b_expand)                # (N, C)
    return x * g[:, :, None, None]


if __name__ == "__main__":
    key = jax.random.PRNGKey(0)

    # Module hyper-parameters (SqueezeExcite defaults):
    # in_chs=16, se_ratio=0.25, divisor=1 -> reduced_chs=4.
    N, C, H, W = 2, 16, 16, 16
    se_ratio = 0.25
    Cred = make_divisible(C * se_ratio, divisor=1)   # 4

    k = jax.random.split(key, 5)
    x = jax.random.normal(k[0], (N, C, H, W), dtype=jnp.float32)
    w_reduce = (0.2 * jax.random.normal(k[1], (Cred, C))).astype(jnp.float32)
    b_reduce = (0.1 * jax.random.normal(k[2], (Cred,))).astype(jnp.float32)
    w_expand = (0.2 * jax.random.normal(k[3], (C, Cred))).astype(jnp.float32)
    b_expand = (0.1 * jax.random.normal(k[4], (C,))).astype(jnp.float32)

    y = squeeze_excite_forward(x, w_reduce, b_reduce, w_expand, b_expand)
    y = jax.block_until_ready(y)

    y_ref = reference_forward(x, w_reduce, b_reduce, w_expand, b_expand)
    assert y.shape == (N, C, H, W)
    np.testing.assert_allclose(np.asarray(y), np.asarray(y_ref), rtol=1e-5, atol=1e-5)

    print("KERNEL_OK")
</pallas_src>

<mosaic_0001>
module attributes {stable_mosaic.version = 11 : i64} {
  func.func @_se_kernel(%arg0: i32, %arg1: memref<2x16x256xf32, #tpu.memory_space<vmem>>, %arg2: memref<16x4xf32, #tpu.memory_space<vmem>>, %arg3: memref<1x4xf32, #tpu.memory_space<vmem>>, %arg4: memref<4x16xf32, #tpu.memory_space<vmem>>, %arg5: memref<1x16xf32, #tpu.memory_space<vmem>>, %arg6: memref<2x16x256xf32, #tpu.memory_space<vmem>>) attributes {dimension_semantics = [#tpu.dimension_semantics<parallel>], iteration_bounds = array<i64: 1>, scalar_prefetch = 0 : i64, scratch_operands = 0 : i64, tpu.core_type = #tpu.core_type<tc>, window_params = [{transform_indices = @transform_0, window_bounds = array<i64: 2, 16, 256>}, {pipeline_mode = #tpu.pipeline_mode<synchronous>, transform_indices = @transform_1, window_bounds = array<i64: 16, 4>}, {pipeline_mode = #tpu.pipeline_mode<synchronous>, transform_indices = @transform_2, window_bounds = array<i64: 1, 4>}, {pipeline_mode = #tpu.pipeline_mode<synchronous>, transform_indices = @transform_3, window_bounds = array<i64: 4, 16>}, {pipeline_mode = #tpu.pipeline_mode<synchronous>, transform_indices = @transform_4, window_bounds = array<i64: 1, 16>}, {transform_indices = @transform_5, window_bounds = array<i64: 2, 16, 256>}]} {
    %c0 = arith.constant 0 : index
    %c0_0 = arith.constant 0 : index
    %c0_1 = arith.constant 0 : index
    %0 = vector.load %arg1[%c0, %c0_0, %c0_1] : memref<2x16x256xf32, #tpu.memory_space<vmem>>, vector<2x16x256xf32>
    %cst = arith.constant dense<0.000000e+00> : vector<2x16xf32>
    %1 = vector.multi_reduction <add>, %0, %cst [2] : vector<2x16x256xf32> to vector<2x16xf32>
    %cst_2 = arith.constant 3.906250e-03 : f32
    %2 = vector.broadcast %cst_2 : f32 to vector<2x16xf32>
    %3 = arith.mulf %1, %2 : vector<2x16xf32>
    %c0_3 = arith.constant 0 : index
    %c0_4 = arith.constant 0 : index
    %4 = vector.load %arg2[%c0_3, %c0_4] : memref<16x4xf32, #tpu.memory_space<vmem>>, vector<16x4xf32>
    %cst_5 = arith.constant dense<0.000000e+00> : vector<2x4xf32>
    %5 = tpu.matmul %3, %4, %cst_5 {dimension_numbers = #tpu.dot_dimension_numbers<[1], [0], [0], [1], [0, 0, 1, 1], [], []>} : vector<2x16xf32>, vector<16x4xf32>, vector<2x4xf32> -> vector<2x4xf32>
    %c0_6 = arith.constant 0 : index
    %c0_7 = arith.constant 0 : index
    %6 = vector.load %arg3[%c0_6, %c0_7] : memref<1x4xf32, #tpu.memory_space<vmem>>, vector<1x4xf32>
    %7 = vector.broadcast %6 : vector<1x4xf32> to vector<2x4xf32>
    %8 = arith.addf %5, %7 : vector<2x4xf32>
    %cst_8 = arith.constant 0.000000e+00 : f32
    %9 = vector.broadcast %cst_8 : f32 to vector<2x4xf32>
    %10 = arith.maximumf %8, %9 : vector<2x4xf32>
    %c0_9 = arith.constant 0 : index
    %c0_10 = arith.constant 0 : index
    %11 = vector.load %arg4[%c0_9, %c0_10] : memref<4x16xf32, #tpu.memory_space<vmem>>, vector<4x16xf32>
    %cst_11 = arith.constant dense<0.000000e+00> : vector<2x16xf32>
    %12 = tpu.matmul %10, %11, %cst_11 {dimension_numbers = #tpu.dot_dimension_numbers<[1], [0], [0], [1], [0, 0, 1, 1], [], []>} : vector<2x4xf32>, vector<4x16xf32>, vector<2x16xf32> -> vector<2x16xf32>
    %c0_12 = arith.constant 0 : index
    %c0_13 = arith.constant 0 : index
    %13 = vector.load %arg5[%c0_12, %c0_13] : memref<1x16xf32, #tpu.memory_space<vmem>>, vector<1x16xf32>
    %14 = vector.broadcast %13 : vector<1x16xf32> to vector<2x16xf32>
    %15 = arith.addf %12, %14 : vector<2x16xf32>
    %cst_14 = arith.constant 0.000000e+00 : f32
    %16 = vector.broadcast %cst_14 : f32 to vector<2x16xf32>
    %17 = arith.subf %16, %15 : vector<2x16xf32>
    %18 = math.exp %17 : vector<2x16xf32>
    %cst_15 = arith.constant 1.000000e+00 : f32
    %19 = vector.broadcast %cst_15 : f32 to vector<2x16xf32>
    %20 = arith.addf %19, %18 : vector<2x16xf32>
    %cst_16 = arith.constant 1.000000e+00 : f32
    %21 = vector.broadcast %cst_16 : f32 to vector<2x16xf32>
    %22 = arith.divf %21, %20 : vector<2x16xf32>
    %c0_17 = arith.constant 0 : index
    %c0_18 = arith.constant 0 : index
    %c0_19 = arith.constant 0 : index
    %23 = vector.load %arg1[%c0_17, %c0_18, %c0_19] : memref<2x16x256xf32, #tpu.memory_space<vmem>>, vector<2x16x256xf32>
    %24 = vector.shape_cast %22 : vector<2x16xf32> to vector<2x16x1xf32>
    %25 = vector.broadcast %24 : vector<2x16x1xf32> to vector<2x16x256xf32>
    %26 = arith.mulf %23, %25 : vector<2x16x256xf32>
    %c0_20 = arith.constant 0 : index
    %c0_21 = arith.constant 0 : index
    %c0_22 = arith.constant 0 : index
    %27 = vector.load %arg6[%c0_20, %c0_21, %c0_22] : memref<2x16x256xf32, #tpu.memory_space<vmem>>, vector<2x16x256xf32>
    tpu.vector_store %arg6[%c0_20, %c0_21, %c0_22], %26 {strides = array<i32>} : memref<2x16x256xf32, #tpu.memory_space<vmem>>, vector<2x16x256xf32>,
    return
  }
  func.func @transform_0(%arg0: i32) -> (i32, i32, i32) {
    %c0_i32 = arith.constant 0 : i32
    %c0_i32_0 = arith.constant 0 : i32
    %c0_i32_1 = arith.constant 0 : i32
    return %arg0, %c0_i32, %c0_i32_0 : i32, i32, i32
  }
  func.func @transform_1(%arg0: i32) -> (i32, i32) {
    %c0_i32 = arith.constant 0 : i32
    %c0_i32_0 = arith.constant 0 : i32
    %c0_i32_1 = arith.constant 0 : i32
    return %c0_i32, %c0_i32_0 : i32, i32
  }
  func.func @transform_2(%arg0: i32) -> (i32, i32) {
    %c0_i32 = arith.constant 0 : i32
    %c0_i32_0 = arith.constant 0 : i32
    %c0_i32_1 = arith.constant 0 : i32
    return %c0_i32, %c0_i32_0 : i32, i32
  }
  func.func @transform_3(%arg0: i32) -> (i32, i32) {
    %c0_i32 = arith.constant 0 : i32
    %c0_i32_0 = arith.constant 0 : i32
    %c0_i32_1 = arith.constant 0 : i32
    return %c0_i32, %c0_i32_0 : i32, i32
  }
  func.func @transform_4(%arg0: i32) -> (i32, i32) {
    %c0_i32 = arith.constant 0 : i32
    %c0_i32_0 = arith.constant 0 : i32
    %c0_i32_1 = arith.constant 0 : i32
    return %c0_i32, %c0_i32_0 : i32, i32
  }
  func.func @transform_5(%arg0: i32) -> (i32, i32, i32) {
    %c0_i32 = arith.constant 0 : i32
    %c0_i32_0 = arith.constant 0 : i32
    %c0_i32_1 = arith.constant 0 : i32
    return %arg0, %c0_i32, %c0_i32_0 : i32, i32, i32
  }
}

</mosaic_0001>

<llo_original>
// kernel: tpu_custom_call.1
$region0: #{tpu_custom_call.1}
  #allocation0 [shape = 'u32[]', space=smem, size = 0x4, offset = 0x4, fixed_abs, tag = 'smem constant byte address 0x4 - core index']
  #allocation1 [shape = 'u32[72,128]{1,0:T(1,128)}', space=vmem, size = 0x9000, scoped, tag = 'internal scratch']
  %s0 = inlined_call_operand.hbm [shape: f32[2,16,256], index: 0, kind: input, shape index: {}]
  %s1 = inlined_call_operand.vmem [shape: f32[16,4], index: 1, kind: input, shape index: {}]
  %s2 = inlined_call_operand.vmem [shape: f32[1,4], index: 2, kind: input, shape index: {}]
  %s3 = inlined_call_operand.vmem [shape: f32[4,16], index: 3, kind: input, shape index: {}]
  %s4 = inlined_call_operand.vmem [shape: f32[1,16], index: 4, kind: input, shape index: {}]
  %s5 = inlined_call_operand.hbm [shape: f32[2,16,256], index: 5, kind: output, shape index: {}]
  %s6 = sld [smem:[#allocation0]]
  $region34: #{tpu_custom_call.1} parent=0
    _
  %s8 = ssub.s32 1, %s6
  %s9 = scalar_select 0, %s8, %s6
  $region1: #{tpu_custom_call.1} parent=0
    #allocation2 [shape = 'u8[32768]{0}', space=vmem, size = 0x8000, scoped, tag = 'input window, operand 0, single buffered']
    #allocation3 [shape = 's32[1]{0}', space=sflag, size = 0x4, scoped, tag = 'scoped memory for tpu_custom_call.1']
    #allocation4 [shape = 's32[1]{0}', space=sflag, size = 0x4, scoped, tag = 'scoped memory for tpu_custom_call.1']
    #allocation5 [shape = 'u8[32768]{0}', space=vmem, size = 0x8000, scoped, tag = 'output window, operand 0, single buffered']
    %10 = vsyncpa [#allocation3], 0
    %11 = vsyncpa [#allocation4], 0
    // Predicated region
    $region2: #{tpu_custom_call.1} parent=1 // pred_check
      _
    $region3: #{tpu_custom_call.1} parent=1 // pred_check_branch
      %13 = sbr.rel (0) target = $region5
    $region4: #{tpu_custom_call.1} parent=1 // pred_region
      %15 = vsyncadd [#allocation3], 0
      %s16 = sshll.u32 %s0, 4
      %s17 = int_to_ptr.hbm [resolvable:$true] %s16
      %s18 = sshll.u32 [#allocation2], 4
      %s19 = int_to_ptr.vmem [resolvable:$true] %s18
      %24 = dma.hbm_to_vmem [thread:$0]  %s17, 1024, %s19, [#allocation3], 256, 256, 16
    $region5: #{tpu_custom_call.1} parent=1 // pred_fallthru
      _
    // Predicated region
    $region6: #{tpu_custom_call.1} parent=1 // pred_check
      _
    $region7: #{tpu_custom_call.1} parent=1 // pred_check_branch
      %26 = sbr.rel (0) target = $region9
    $region8: #{tpu_custom_call.1} parent=1 // pred_region
      _
    $region9: #{tpu_custom_call.1} parent=1 // pred_fallthru
      _
    // Predicated region
    $region10: #{tpu_custom_call.1} parent=1 // pred_check
      _
    $region11: #{tpu_custom_call.1} parent=1 // pred_check_branch
      %28 = sbr.rel (0) target = $region13
    $region12: #{tpu_custom_call.1} parent=1 // pred_region
      _
    $region13: #{tpu_custom_call.1} parent=1 // pred_fallthru
      _
    // Predicated region
    $region14: #{tpu_custom_call.1} parent=1 // pred_check
      _
    $region15: #{tpu_custom_call.1} parent=1 // pred_check_branch
      %30 = sbr.rel (0) target = $region17
    $region16: #{tpu_custom_call.1} parent=1 // pred_region
      _
    $region17: #{tpu_custom_call.1} parent=1 // pred_fallthru
      _
    // Predicated region
    $region18: #{tpu_custom_call.1} parent=1 // pred_check
      _
    $region19: #{tpu_custom_call.1} parent=1 // pred_check_branch
      %32 = sbr.rel (0) target = $region21
    $region20: #{tpu_custom_call.1} parent=1 // pred_region
      _
    $region21: #{tpu_custom_call.1} parent=1 // pred_fallthru
      _
    // Predicated region
    $region22: #{tpu_custom_call.1} parent=1 // pred_check
      _
    $region23: #{tpu_custom_call.1} parent=1 // pred_check_branch
      %34 = sbr.rel (0) target = $region25
    $region24: #{tpu_custom_call.1} parent=1 // pred_region
      %36 = dma.done [#allocation3], 1024
    $region25: #{tpu_custom_call.1} parent=1 // pred_fallthru
      _
    %v37 = vld [vmem:[#allocation2] sm:$0xff]
    %v38 = vld [vmem:[#allocation2 + $0x8] sm:$0xff]
    %v39 = vld [vmem:[#allocation2 + $0x10] sm:$0xff]
    %v40 = vld [vmem:[#allocation2 + $0x18] sm:$0xff]
    %v41 = vld [vmem:[#allocation2 + $0x20] sm:$0xff]
    %v42 = vld [vmem:[#allocation2 + $0x28] sm:$0xff]
    %v43 = vld [vmem:[#allocation2 + $0x30] sm:$0xff]
    %v44 = vld [vmem:[#allocation2 + $0x38] sm:$0xff]
    %v45 = vadd.f32 %v37, %v38
    %46 = vadd.xlane.f32.xlu0 %v45
    %v47 = vpop.xlane.xlu0 %46
    %v48 = vadd.f32 %v39, %v40
    %49 = vadd.xlane.f32.xlu0 %v48
    %v50 = vpop.xlane.xlu0 %49
    %v51 = vadd.f32 %v41, %v42
    %52 = vadd.xlane.f32.xlu0 %v51
    %v53 = vpop.xlane.xlu0 %52
    %v54 = vadd.f32 %v43, %v44
    %55 = vadd.xlane.f32.xlu0 %v54
    %v56 = vpop.xlane.xlu0 %55
    %v57 = vmul.f32 %v47, 0.00390625
    %v58 = vmul.f32 %v50, 0.00390625
    %v59 = vmul.f32 %v53, 0.00390625
    %v60 = vmul.f32 %v56, 0.00390625
    %v61 = vld [vmem:[%s1] sm:$0xff]
    %v62 = vld [vmem:[%s1 + $0x8] sm:$0xff]
    %v63 = vld [vmem:[%s2] sm:$0x1]
    %v65 = vperm.slane %v63, 0
    %v71 = vlaneseq
    %v72 = vand.u32 %v71, 127
    %v73 = vperm.slane %v57, %v72
    %v74 = vadd.s32 %v72, 4294967288
    %v75 = vperm.slane %v58, %v74
    %vm76 = vcmask 130112
    %v77 = vsel %vm76, %v75, %v73
    %v78 = vperm.slane %v59, %v72
    %v79 = vperm.slane %v60, %v74
    %v80 = vsel %vm76, %v79, %v78
    %vm81 = vcmask 1041409
    %v82 = vsel %vm81, %v80, %v77
    %vm83 = vcmask 130048
    %v84 = vsel %vm83, %v82, 0
    %86 = vmatpush.msra.mxu0 0.0
    %87 = vmatpush.msra.mxu0 0.0
    %88 = vmatpush.msra.mxu0 0.0
    %89 = vmatpush.msra.mxu0 0.0
    %90 = vmatpush.msra.mxu0 0.0
    %91 = vmatpush.msra.mxu0 0.0
    %92 = vmatpush.msra.mxu0 0.0
    %93 = vmatpush.msra.mxu0 0.0
    %94 = vmatpush.msra.mxu0 0.0
    %95 = vmatpush.msra.mxu0 0.0
    %96 = vmatpush.msra.mxu0 0.0
    %97 = vmatpush.msra.mxu0 0.0
    %98 = vmatpush.msra.mxu0 0.0
    %99 = vmatpush.msra.mxu0 0.0
    %100 = vmatpush.msra.mxu0 %v62
    %101 = vmatpush.msra.mxu0 %v61
    %102 = vmatmul.f32.gmra.mxu0 %v84
    %v103 = vpop.f32.mrf.mxu0
    %v104 = vadd.f32 %v65, %v103
    %105 = vdwg.mxu0
    %v106 = vmax.f32 %v104, 0.0
    %v107 = vld [vmem:[%s3] sm:$0xf]
    %v108 = vld [vmem:[%s4] sm:$0x1]
    %v110 = vperm.slane %v108, 0
    %vm112 = vcmask 31744
    %v114 = vsel %vm112, %v106, 0
    %vm116 = vcmask 1043456
    %v118 = vsel %vm116, %v107, 0
    %120 = vmatpush.msra.mxu0 0.0
    %121 = vmatpush.msra.mxu0 0.0
    %122 = vmatpush.msra.mxu0 0.0
    %123 = vmatpush.msra.mxu0 0.0
    %124 = vmatpush.msra.mxu0 0.0
    %125 = vmatpush.msra.mxu0 0.0
    %126 = vmatpush.msra.mxu0 0.0
    %127 = vmatpush.msra.mxu0 0.0
    %128 = vmatpush.msra.mxu0 0.0
    %129 = vmatpush.msra.mxu0 0.0
    %130 = vmatpush.msra.mxu0 0.0
    %131 = vmatpush.msra.mxu0 0.0
    %132 = vmatpush.msra.mxu0 0.0
    %133 = vmatpush.msra.mxu0 0.0
    %134 = vmatpush.msra.mxu0 0.0
    %135 = vmatpush.msra.mxu0 %v118
    %136 = vmatmul.f32.gmra.mxu0 %v114
    %v137 = vpop.f32.mrf.mxu0
    %v138 = vadd.f32 %v110, %v137
    %139 = vdwg.mxu0
    %v140 = vsub.f32 0.0, %v138
    %v141 = vmul.f32 %v140, 1.442695
    %v142 = vpow.pop %v141
    %v143 = vadd.f32 %v142, 1.0
    %v144 = vrcp.pop %v143
    %v145 = vmul.f32 %v143, %v144
    %v146 = vsub.f32 1.0, %v145
    %v147 = vmul.f32 %v144, %v146
    %v148 = vadd.f32 %v144, %v147
    %vm149 = vweird.f32 %v143
    %vm150 = vweird.f32 %v144
    %vm151 = vmor %vm149, %vm150
    %v152 = vsel %vm151, %v144, %v148
    %v153 = vand.u32 2147483647, %v143
    %vm154 = vcmp.eq.f32.partialorder %v153, 8.507059e+37
    %v155 = vand.u32 %v143, 2147483648
    %v156 = vor.u32 1.1754944e-38, %v155
    %v157 = vsel %vm154, %v156, %v152
    %v158 = vmul.f32 1.0, %v157
    %v159 = vperm.slane %v158, 0
    %v160 = vlaneseq
    %v161 = vshrl.u32 %v160, 7
    %163 = vset.pattern.permute.xlu0 %v161
    %164 = vperm.xlu0 %163, %v159
    %v165 = vpop.permute.xlu0 %164
    %v166 = vlaneseq
    %v167 = vshrl.u32 %v166, 7
    %v168 = vadd.s32 %v167, 8
    %169 = vset.pattern.permute.xlu0 %v168
    %170 = vperm.xlu0 %169, %v159
    %v171 = vpop.permute.xlu0 %170
    %v172 = vperm.slane %v158, 1
    %v173 = vlaneseq
    %v174 = vshrl.u32 %v173, 7
    %176 = vset.pattern.permute.xlu0 %v174
    %177 = vperm.xlu0 %176, %v172
    %v178 = vpop.permute.xlu0 %177
    %v179 = vlaneseq
    %v180 = vshrl.u32 %v179, 7
    %v181 = vadd.s32 %v180, 8
    %182 = vset.pattern.permute.xlu0 %v181
    %183 = vperm.xlu0 %182, %v172
    %v184 = vpop.permute.xlu0 %183
    %v185 = vmul.f32 %v37, %v165
    %v186 = vmul.f32 %v38, %v165
    %v187 = vmul.f32 %v39, %v171
    %v188 = vmul.f32 %v40, %v171
    %v189 = vmul.f32 %v41, %v178
    %v190 = vmul.f32 %v42, %v178
    %v191 = vmul.f32 %v43, %v184
    %v192 = vmul.f32 %v44, %v184
    %193 = vst [vmem:[#allocation5] sm:$0xff] %v185
    %194 = vst [vmem:[#allocation5 + $0x8] sm:$0xff] %v186
    %195 = vst [vmem:[#allocation5 + $0x10] sm:$0xff] %v187
    %196 = vst [vmem:[#allocation5 + $0x18] sm:$0xff] %v188
    %197 = vst [vmem:[#allocation5 + $0x20] sm:$0xff] %v189
    %198 = vst [vmem:[#allocation5 + $0x28] sm:$0xff] %v190
    %199 = vst [vmem:[#allocation5 + $0x30] sm:$0xff] %v191
    %200 = vst [vmem:[#allocation5 + $0x38] sm:$0xff] %v192
    // Predicated region
    $region26: #{tpu_custom_call.1} parent=1 // pred_check
      _
    $region27: #{tpu_custom_call.1} parent=1 // pred_check_branch
      %202 = sbr.rel (0) target = $region29
    $region28: #{tpu_custom_call.1} parent=1 // pred_region
      %204 = vsyncadd [#allocation4], 0
      %s205 = sshll.u32 [#allocation5], 4
      %s206 = int_to_ptr.vmem [resolvable:$true] %s205
      %s207 = sshll.u32 %s5, 4
      %s208 = int_to_ptr.hbm [resolvable:$true] %s207
      %213 = dma.vmem_to_hbm [thread:$0]  %s206, 1024, %s208, [#allocation4], 256, 256, 16
    $region29: #{tpu_custom_call.1} parent=1 // pred_fallthru
      _
    // Predicated region
    $region30: #{tpu_custom_call.1} parent=1 // pred_check
      _
    $region31: #{tpu_custom_call.1} parent=1 // pred_check_branch
      %215 = sbr.rel (0) target = $region33
    $region32: #{tpu_custom_call.1} parent=1 // pred_region
      %217 = dma.done [#allocation4], 1024
    $region33: #{tpu_custom_call.1} parent=1 // pred_fallthru
      _
    %218 = vsyncpa [#allocation3], 1
    %219 = vsyncpa [#allocation4], 1

</llo_original>
